<compile_context>
chip_gen: v6e
topology: v6e:2x2x1
jax: 0.10.0
libtpu: 0.0.40
codegen_flags: <defaults>
</compile_context>

<pallas_src>
import functools

import jax
import jax.numpy as jnp
from jax.experimental import pallas as pl
from jax.experimental.pallas import tpu as pltpu

LANE = 128


def _round_up(x, m):
    return (x + m - 1) // m * m


# --------------------------------------------------------------------------- #
# Kernel: x [TB, D]  @  W[3, D, D]  (+ b[3, 1, D])  ->  out [TB, D]
#   cols 0..A-1 of `out` are softmax(actor logits), col A is the critic value.
# --------------------------------------------------------------------------- #
def actor_critic_kernel(x_ref, w_ref, b_ref, out_ref, *, action_dim):
    x = x_ref[...]                                                   # [TB, D]

    # layer 1 (both heads): ReLU(x @ [wa1|wc1] + [ba1|bc1])
    h = jnp.dot(x, w_ref[0], preferred_element_type=jnp.float32) + b_ref[0]
    h = jnp.maximum(h, 0.0)
    # layer 2 (block-diagonal): ReLU(h @ blockdiag(wa2, wc2) + [ba2|bc2])
    h = jnp.dot(h, w_ref[1], preferred_element_type=jnp.float32) + b_ref[1]
    h = jnp.maximum(h, 0.0)
    # layer 3: cols 0..A-1 = actor logits, col A = critic value, rest exactly 0
    z = jnp.dot(h, w_ref[2], preferred_element_type=jnp.float32) + b_ref[2]

    # masked (lane-dense) softmax over the actor columns only
    col = jax.lax.broadcasted_iota(jnp.int32, z.shape, 1)
    is_actor = col < action_dim
    logits = jnp.where(is_actor, z, jnp.float32(-1e30))   # exp() underflows to 0
    m = jnp.max(logits, axis=-1, keepdims=True)
    e = jnp.exp(logits - m)                                # 0 outside actor cols
    denom = jnp.sum(e, axis=-1, keepdims=True)
    probs = e * pl.reciprocal(denom, approx=False)         # exact (1e-5 tol)

    # single lane-dense store: probs in cols <A, value in col A, zeros elsewhere
    out = probs + jnp.where(col == action_dim, z, 0.0)
    out_ref[...] = out.astype(out_ref.dtype)


# --------------------------------------------------------------------------- #
# Host-side packing of the 12 PyTorch-style parameters into 2 slabs.
# --------------------------------------------------------------------------- #
def pack_params(params, state_dim, hidden_dim, action_dim):
    H, H2 = hidden_dim, 2 * hidden_dim
    D = _round_up(max(state_dim, H2, action_dim + 1), LANE)

    w = jnp.zeros((3, D, D), jnp.float32)
    # layer 1: [wa1 | wc1]
    w = w.at[0, :state_dim, :H].set(params["wa1"])
    w = w.at[0, :state_dim, H:H2].set(params["wc1"])
    # layer 2: blockdiag(wa2, wc2)
    w = w.at[1, :H, :H].set(params["wa2"])
    w = w.at[1, H:H2, H:H2].set(params["wc2"])
    # layer 3: actor -> cols 0..A-1, critic -> col A
    w = w.at[2, :H, :action_dim].set(params["wa3"])
    w = w.at[2, H:H2, action_dim].set(params["wc3"][:, 0])

    b = jnp.zeros((3, 1, D), jnp.float32)
    b = b.at[0, 0, :H].set(params["ba1"][0])
    b = b.at[0, 0, H:H2].set(params["bc1"][0])
    b = b.at[1, 0, :H].set(params["ba2"][0])
    b = b.at[1, 0, H:H2].set(params["bc2"][0])
    b = b.at[2, 0, :action_dim].set(params["ba3"][0])
    b = b.at[2, 0, action_dim].set(params["bc3"][0, 0])
    return w, b


def actor_critic_forward(state, w_slab, b_slab, *, action_dim, block_b=128):
    """state: [B, state_dim] f32; w_slab: [3, D, D]; b_slab: [3, 1, D]."""
    B, state_dim = state.shape
    D = w_slab.shape[-1]

    TB = min(block_b, _round_up(B, 8))          # batch tile (sublane-aligned)
    Bp = _round_up(B, TB)
    # pad batch rows and feature lanes with exact zeros (padded weight rows are 0)
    xp = jnp.zeros((Bp, D), jnp.float32).at[:B, :state_dim].set(state)

    grid = (Bp // TB,)
    kernel = functools.partial(actor_critic_kernel, action_dim=action_dim)

    bytes_accessed = 4 * (xp.size + w_slab.size + b_slab.size + Bp * D)
    out = pl.pallas_call(
        kernel,
        out_shape=jax.ShapeDtypeStruct((Bp, D), jnp.float32),
        grid=grid,
        in_specs=[
            pl.BlockSpec((TB, D), lambda i: (i, 0)),           # x: streamed
            pl.BlockSpec((3, D, D), lambda i: (0, 0, 0)),      # weights: resident
            pl.BlockSpec((3, 1, D), lambda i: (0, 0, 0)),      # biases: resident
        ],
        out_specs=pl.BlockSpec((TB, D), lambda i: (i, 0)),
        compiler_params=pltpu.CompilerParams(
            dimension_semantics=("parallel",)),
        cost_estimate=pl.CostEstimate(
            flops=2 * Bp * D * D * 3,
            transcendentals=Bp * action_dim,
            bytes_accessed=bytes_accessed),
    )(xp, w_slab, b_slab)

    probs = out[:B, :action_dim]
    value = out[:B, action_dim:action_dim + 1]
    return probs, value


# --------------------------------------------------------------------------- #
# Parameter init (PyTorch-style uniform +/- 1/sqrt(fan_in), weights as [in,out])
# and a plain-JAX reference matching the nn.Module semantics.
# --------------------------------------------------------------------------- #
def init_params(key, state_dim, action_dim, hidden_dim):
    dims = {
        "a1": (state_dim, hidden_dim), "a2": (hidden_dim, hidden_dim),
        "a3": (hidden_dim, action_dim),
        "c1": (state_dim, hidden_dim), "c2": (hidden_dim, hidden_dim),
        "c3": (hidden_dim, 1),
    }
    params = {}
    keys = jax.random.split(key, 2 * len(dims))
    for i, (name, (fan_in, fan_out)) in enumerate(dims.items()):
        bound = 1.0 / jnp.sqrt(jnp.float32(fan_in))
        params["w" + name] = jax.random.uniform(
            keys[2 * i], (fan_in, fan_out), jnp.float32, -bound, bound)
        params["b" + name] = jax.random.uniform(
            keys[2 * i + 1], (1, fan_out), jnp.float32, -bound, bound)
    return params


def reference_forward(state, p):
    def mlp(x, w1, b1, w2, b2, w3, b3):
        h = jnp.maximum(x @ w1 + b1, 0.0)
        h = jnp.maximum(h @ w2 + b2, 0.0)
        return h @ w3 + b3
    logits = mlp(state, p["wa1"], p["ba1"], p["wa2"], p["ba2"], p["wa3"], p["ba3"])
    probs = jax.nn.softmax(logits, axis=-1)
    value = mlp(state, p["wc1"], p["bc1"], p["wc2"], p["bc2"], p["wc3"], p["bc3"])
    return probs, value


if __name__ == "__main__":
    key = jax.random.PRNGKey(0)
    k_x, k_p = jax.random.split(key)

    B, state_dim, action_dim, hidden_dim = 8, 16, 8, 32
    state = jax.random.normal(k_x, (B, state_dim), jnp.float32)
    params = init_params(k_p, state_dim, action_dim, hidden_dim)
    w_slab, b_slab = pack_params(params, state_dim, hidden_dim, action_dim)

    probs, value = actor_critic_forward(state, w_slab, b_slab,
                                        action_dim=action_dim)
    jax.block_until_ready((probs, value))

    probs_ref, value_ref = reference_forward(state, params)
    assert probs.shape == (B, action_dim) and value.shape == (B, 1)
    assert jnp.allclose(probs, probs_ref, atol=1e-5, rtol=1e-5)
    assert jnp.allclose(value, value_ref, atol=1e-5, rtol=1e-5)
    assert jnp.allclose(jnp.sum(probs, axis=-1), 1.0, atol=1e-5)

    print("KERNEL_OK")
</pallas_src>

<mosaic_0001>
module attributes {stable_mosaic.version = 11 : i64} {
  func.func @actor_critic_kernel(%arg0: i32, %arg1: memref<8x128xf32, #tpu.memory_space<vmem>>, %arg2: memref<3x128x128xf32, #tpu.memory_space<vmem>>, %arg3: memref<3x1x128xf32, #tpu.memory_space<vmem>>, %arg4: memref<8x128xf32, #tpu.memory_space<vmem>>) attributes {dimension_semantics = [#tpu.dimension_semantics<parallel>], iteration_bounds = array<i64: 1>, scalar_prefetch = 0 : i64, scratch_operands = 0 : i64, tpu.core_type = #tpu.core_type<tc>, window_params = [{transform_indices = @transform_0, window_bounds = array<i64: 8, 128>}, {pipeline_mode = #tpu.pipeline_mode<synchronous>, transform_indices = @transform_1, window_bounds = array<i64: 3, 128, 128>}, {pipeline_mode = #tpu.pipeline_mode<synchronous>, transform_indices = @transform_2, window_bounds = array<i64: 3, 1, 128>}, {transform_indices = @transform_3, window_bounds = array<i64: 8, 128>}]} {
    %c0 = arith.constant 0 : index
    %c0_0 = arith.constant 0 : index
    %0 = vector.load %arg1[%c0, %c0_0] : memref<8x128xf32, #tpu.memory_space<vmem>>, vector<8x128xf32>
    %c0_1 = arith.constant 0 : index
    %c0_2 = arith.constant 0 : index
    %c0_3 = arith.constant 0 : index
    %1 = vector.load %arg2[%c0_1, %c0_2, %c0_3] : memref<3x128x128xf32, #tpu.memory_space<vmem>>, vector<1x128x128xf32>
    %2 = vector.shape_cast %1 : vector<1x128x128xf32> to vector<128x128xf32>
    %cst = arith.constant dense<0.000000e+00> : vector<8x128xf32>
    %3 = tpu.matmul %0, %2, %cst {dimension_numbers = #tpu.dot_dimension_numbers<[1], [0], [0], [1], [0, 0, 1, 1], [], []>} : vector<8x128xf32>, vector<128x128xf32>, vector<8x128xf32> -> vector<8x128xf32>
    %c0_4 = arith.constant 0 : index
    %c0_5 = arith.constant 0 : index
    %c0_6 = arith.constant 0 : index
    %4 = vector.load %arg3[%c0_4, %c0_5, %c0_6] : memref<3x1x128xf32, #tpu.memory_space<vmem>>, vector<1x1x128xf32>
    %5 = vector.shape_cast %4 : vector<1x1x128xf32> to vector<1x128xf32>
    %6 = vector.broadcast %5 : vector<1x128xf32> to vector<8x128xf32>
    %7 = arith.addf %3, %6 : vector<8x128xf32>
    %cst_7 = arith.constant 0.000000e+00 : f32
    %8 = vector.broadcast %cst_7 : f32 to vector<8x128xf32>
    %9 = arith.maximumf %7, %8 : vector<8x128xf32>
    %c1 = arith.constant 1 : index
    %c0_8 = arith.constant 0 : index
    %c0_9 = arith.constant 0 : index
    %10 = vector.load %arg2[%c1, %c0_8, %c0_9] : memref<3x128x128xf32, #tpu.memory_space<vmem>>, vector<1x128x128xf32>
    %11 = vector.shape_cast %10 : vector<1x128x128xf32> to vector<128x128xf32>
    %cst_10 = arith.constant dense<0.000000e+00> : vector<8x128xf32>
    %12 = tpu.matmul %9, %11, %cst_10 {dimension_numbers = #tpu.dot_dimension_numbers<[1], [0], [0], [1], [0, 0, 1, 1], [], []>} : vector<8x128xf32>, vector<128x128xf32>, vector<8x128xf32> -> vector<8x128xf32>
    %c1_11 = arith.constant 1 : index
    %c0_12 = arith.constant 0 : index
    %c0_13 = arith.constant 0 : index
    %13 = vector.load %arg3[%c1_11, %c0_12, %c0_13] : memref<3x1x128xf32, #tpu.memory_space<vmem>>, vector<1x1x128xf32>
    %14 = vector.shape_cast %13 : vector<1x1x128xf32> to vector<1x128xf32>
    %15 = vector.broadcast %14 : vector<1x128xf32> to vector<8x128xf32>
    %16 = arith.addf %12, %15 : vector<8x128xf32>
    %cst_14 = arith.constant 0.000000e+00 : f32
    %17 = vector.broadcast %cst_14 : f32 to vector<8x128xf32>
    %18 = arith.maximumf %16, %17 : vector<8x128xf32>
    %c2 = arith.constant 2 : index
    %c0_15 = arith.constant 0 : index
    %c0_16 = arith.constant 0 : index
    %19 = vector.load %arg2[%c2, %c0_15, %c0_16] : memref<3x128x128xf32, #tpu.memory_space<vmem>>, vector<1x128x128xf32>
    %20 = vector.shape_cast %19 : vector<1x128x128xf32> to vector<128x128xf32>
    %cst_17 = arith.constant dense<0.000000e+00> : vector<8x128xf32>
    %21 = tpu.matmul %18, %20, %cst_17 {dimension_numbers = #tpu.dot_dimension_numbers<[1], [0], [0], [1], [0, 0, 1, 1], [], []>} : vector<8x128xf32>, vector<128x128xf32>, vector<8x128xf32> -> vector<8x128xf32>
    %c2_18 = arith.constant 2 : index
    %c0_19 = arith.constant 0 : index
    %c0_20 = arith.constant 0 : index
    %22 = vector.load %arg3[%c2_18, %c0_19, %c0_20] : memref<3x1x128xf32, #tpu.memory_space<vmem>>, vector<1x1x128xf32>
    %23 = vector.shape_cast %22 : vector<1x1x128xf32> to vector<1x128xf32>
    %24 = vector.broadcast %23 : vector<1x128xf32> to vector<8x128xf32>
    %25 = arith.addf %21, %24 : vector<8x128xf32>
    %26 = tpu.iota {dimensions = array<i32: 1>} : vector<8x128xi32>
    %c8_i32 = arith.constant 8 : i32
    %27 = vector.broadcast %c8_i32 : i32 to vector<8x128xi32>
    %28 = arith.cmpi slt, %26, %27 : vector<8x128xi32>
    %cst_21 = arith.constant -1.000000e+30 : f32
    %29 = vector.broadcast %cst_21 : f32 to vector<8x128xf32>
    %30 = arith.select %28, %25, %29 : vector<8x128xi1>, vector<8x128xf32>
    %cst_22 = arith.constant dense<0xFF800000> : vector<8xf32>
    %31 = vector.multi_reduction <maximumf>, %30, %cst_22 [1] : vector<8x128xf32> to vector<8xf32>
    %32 = vector.shape_cast %31 : vector<8xf32> to vector<8x1xf32>
    %33 = vector.broadcast %32 : vector<8x1xf32> to vector<8x128xf32>
    %34 = arith.subf %30, %33 : vector<8x128xf32>
    %35 = math.exp %34 : vector<8x128xf32>
    %cst_23 = arith.constant dense<0.000000e+00> : vector<8xf32>
    %36 = vector.multi_reduction <add>, %35, %cst_23 [1] : vector<8x128xf32> to vector<8xf32>
    %37 = vector.shape_cast %36 : vector<8xf32> to vector<8x1xf32>
    %38 = tpu.reciprocal %37 : vector<8x1xf32> -> vector<8x1xf32>
    %39 = vector.broadcast %38 : vector<8x1xf32> to vector<8x128xf32>
    %40 = arith.mulf %35, %39 : vector<8x128xf32>
    %c8_i32_24 = arith.constant 8 : i32
    %41 = vector.broadcast %c8_i32_24 : i32 to vector<8x128xi32>
    %42 = arith.cmpi eq, %26, %41 : vector<8x128xi32>
    %cst_25 = arith.constant 0.000000e+00 : f32
    %43 = vector.broadcast %cst_25 : f32 to vector<8x128xf32>
    %44 = arith.select %42, %25, %43 : vector<8x128xi1>, vector<8x128xf32>
    %45 = arith.addf %40, %44 : vector<8x128xf32>
    %c0_26 = arith.constant 0 : index
    %c0_27 = arith.constant 0 : index
    %46 = vector.load %arg4[%c0_26, %c0_27] : memref<8x128xf32, #tpu.memory_space<vmem>>, vector<8x128xf32>
    tpu.vector_store %arg4[%c0_26, %c0_27], %45 {strides = array<i32>} : memref<8x128xf32, #tpu.memory_space<vmem>>, vector<8x128xf32>,
    return
  }
  func.func @transform_0(%arg0: i32) -> (i32, i32) {
    %c0_i32 = arith.constant 0 : i32
    %c0_i32_0 = arith.constant 0 : i32
    return %arg0, %c0_i32 : i32, i32
  }
  func.func @transform_1(%arg0: i32) -> (i32, i32, i32) {
    %c0_i32 = arith.constant 0 : i32
    %c0_i32_0 = arith.constant 0 : i32
    %c0_i32_1 = arith.constant 0 : i32
    %c0_i32_2 = arith.constant 0 : i32
    return %c0_i32, %c0_i32_0, %c0_i32_1 : i32, i32, i32
  }
  func.func @transform_2(%arg0: i32) -> (i32, i32, i32) {
    %c0_i32 = arith.constant 0 : i32
    %c0_i32_0 = arith.constant 0 : i32
    %c0_i32_1 = arith.constant 0 : i32
    %c0_i32_2 = arith.constant 0 : i32
    return %c0_i32, %c0_i32_0, %c0_i32_1 : i32, i32, i32
  }
  func.func @transform_3(%arg0: i32) -> (i32, i32) {
    %c0_i32 = arith.constant 0 : i32
    %c0_i32_0 = arith.constant 0 : i32
    return %arg0, %c0_i32 : i32, i32
  }
}

</mosaic_0001>

<llo_original>
// kernel: tpu_custom_call.1
$region0: #{tpu_custom_call.1}
  #allocation0 [shape = 'u32[]', space=smem, size = 0x4, offset = 0x4, fixed_abs, tag = 'smem constant byte address 0x4 - core index']
  #allocation1 [shape = 'u32[144,128]{1,0:T(1,128)}', space=vmem, size = 0x12000, scoped, tag = 'internal scratch']
  %s0 = inlined_call_operand.hbm [shape: f32[8,128], index: 0, kind: input, shape index: {}]
  %s1 = inlined_call_operand.hbm [shape: f32[3,128,128], index: 1, kind: input, shape index: {}]
  %s2 = inlined_call_operand.vmem [shape: f32[3,1,128], index: 2, kind: input, shape index: {}]
  %s3 = inlined_call_operand.hbm [shape: f32[8,128], index: 3, kind: output, shape index: {}]
  %s4 = sld [smem:[#allocation0]]
  $region30: #{tpu_custom_call.1} parent=0
    _
  %s6 = ssub.s32 1, %s4
  %s7 = scalar_select 0, %s6, %s4
  $region1: #{tpu_custom_call.1} parent=0
    #allocation2 [shape = 'u8[4096]{0}', space=vmem, size = 0x1000, scoped, tag = 'input window, operand 0, single buffered']
    #allocation3 [shape = 's32[1]{0}', space=sflag, size = 0x4, scoped, tag = 'scoped memory for tpu_custom_call.1']
    #allocation4 [shape = 's32[1]{0}', space=sflag, size = 0x4, scoped, tag = 'scoped memory for tpu_custom_call.1']
    #allocation5 [shape = 'u8[196608]{0}', space=vmem, size = 0x30000, scoped, tag = 'input window, operand 1, single buffered']
    #allocation6 [shape = 's32[1]{0}', space=sflag, size = 0x4, scoped, tag = 'scoped memory for tpu_custom_call.1']
    #allocation7 [shape = 'u8[4096]{0}', space=vmem, size = 0x1000, scoped, tag = 'output window, operand 0, single buffered']
    %8 = vsyncpa [#allocation3], 0
    %9 = vsyncpa [#allocation6], 0
    %10 = vsyncpa [#allocation4], 0
    // Predicated region
    $region2: #{tpu_custom_call.1} parent=1 // pred_check
      _
    $region3: #{tpu_custom_call.1} parent=1 // pred_check_branch
      %12 = sbr.rel (0) target = $region5
    $region4: #{tpu_custom_call.1} parent=1 // pred_region
      %s14 = ssub.s32 128, 128
      %15 = vsyncadd [#allocation3], %s14
      %s17 = sshll.u32 [#allocation2], 4
      %s18 = int_to_ptr.vmem [resolvable:$true] %s17
      %20 = dma.hbm_to_vmem [thread:$0]  %s0, 128, %s18, [#allocation3]
    $region5: #{tpu_custom_call.1} parent=1 // pred_fallthru
      _
    // Predicated region
    $region6: #{tpu_custom_call.1} parent=1 // pred_check
      _
    $region7: #{tpu_custom_call.1} parent=1 // pred_check_branch
      %22 = sbr.rel (0) target = $region9
    $region8: #{tpu_custom_call.1} parent=1 // pred_region
      %s24 = ssub.s32 6144, 6144
      %25 = vsyncadd [#allocation6], %s24
      %s26 = sshll.u32 [#allocation5], 4
      %s27 = int_to_ptr.vmem [resolvable:$true] %s26
      %32 = dma.hbm_to_vmem [thread:$0]  %s1, 6144, %s27, [#allocation6], 128, 128, 8
    $region9: #{tpu_custom_call.1} parent=1 // pred_fallthru
      _
    // Predicated region
    $region10: #{tpu_custom_call.1} parent=1 // pred_check
      _
    $region11: #{tpu_custom_call.1} parent=1 // pred_check_branch
      %34 = sbr.rel (0) target = $region13
    $region12: #{tpu_custom_call.1} parent=1 // pred_region
      _
    $region13: #{tpu_custom_call.1} parent=1 // pred_fallthru
      _
    // Predicated region
    $region14: #{tpu_custom_call.1} parent=1 // pred_check
      _
    $region15: #{tpu_custom_call.1} parent=1 // pred_check_branch
      %36 = sbr.rel (0) target = $region17
    $region16: #{tpu_custom_call.1} parent=1 // pred_region
      %37 = dma.done [#allocation3], 128
    $region17: #{tpu_custom_call.1} parent=1 // pred_fallthru
      _
    // Predicated region
    $region18: #{tpu_custom_call.1} parent=1 // pred_check
      _
    $region19: #{tpu_custom_call.1} parent=1 // pred_check_branch
      %39 = sbr.rel (0) target = $region21
    $region20: #{tpu_custom_call.1} parent=1 // pred_region
      %40 = dma.done [#allocation6], 6144
    $region21: #{tpu_custom_call.1} parent=1 // pred_fallthru
      _
    %v41 = vld [vmem:[#allocation2] sm:$0xff]
    %v42 = vld [vmem:[#allocation5] sm:$0xff]
    %v43 = vld [vmem:[#allocation5 + $0x8] sm:$0xff]
    %v44 = vld [vmem:[#allocation5 + $0x10] sm:$0xff]
    %v45 = vld [vmem:[#allocation5 + $0x18] sm:$0xff]
    %v46 = vld [vmem:[#allocation5 + $0x20] sm:$0xff]
    %v47 = vld [vmem:[#allocation5 + $0x28] sm:$0xff]
    %v48 = vld [vmem:[#allocation5 + $0x30] sm:$0xff]
    %v49 = vld [vmem:[#allocation5 + $0x38] sm:$0xff]
    %v50 = vld [vmem:[#allocation5 + $0x40] sm:$0xff]
    %v51 = vld [vmem:[#allocation5 + $0x48] sm:$0xff]
    %v52 = vld [vmem:[#allocation5 + $0x50] sm:$0xff]
    %v53 = vld [vmem:[#allocation5 + $0x58] sm:$0xff]
    %v54 = vld [vmem:[#allocation5 + $0x60] sm:$0xff]
    %v55 = vld [vmem:[#allocation5 + $0x68] sm:$0xff]
    %v56 = vld [vmem:[#allocation5 + $0x70] sm:$0xff]
    %v57 = vld [vmem:[#allocation5 + $0x78] sm:$0xff]
    %v58 = vld [vmem:[%s2] sm:$0x1]
    %v60 = vlaneseq
    %v61 = vshrl.u32 %v60, 7
    %v62 = vsub.s32 0, %v61
    %v63 = vrot.slane %v58, %v62
    %65 = vmatprep.subr.mxu0 0.0
    %66 = vmatpush1.msra.mxu0 %v57
    %67 = vmatprep.subr.mxu0 0.0
    %68 = vmatpush1.msra.mxu0 %v56
    %69 = vmatprep.subr.mxu0 0.0
    %70 = vmatpush1.msra.mxu0 %v55
    %71 = vmatprep.subr.mxu0 0.0
    %72 = vmatpush1.msra.mxu0 %v54
    %73 = vmatprep.subr.mxu0 0.0
    %74 = vmatpush1.msra.mxu0 %v53
    %75 = vmatprep.subr.mxu0 0.0
    %76 = vmatpush1.msra.mxu0 %v52
    %77 = vmatprep.subr.mxu0 0.0
    %78 = vmatpush1.msra.mxu0 %v51
    %79 = vmatprep.subr.mxu0 0.0
    %80 = vmatpush1.msra.mxu0 %v50
    %81 = vmatprep.subr.mxu0 0.0
    %82 = vmatpush1.msra.mxu0 %v49
    %83 = vmatprep.subr.mxu0 0.0
    %84 = vmatpush1.msra.mxu0 %v48
    %85 = vmatprep.subr.mxu0 0.0
    %86 = vmatpush1.msra.mxu0 %v47
    %87 = vmatprep.subr.mxu0 0.0
    %88 = vmatpush1.msra.mxu0 %v46
    %89 = vmatprep.subr.mxu0 0.0
    %90 = vmatpush1.msra.mxu0 %v45
    %91 = vmatprep.subr.mxu0 0.0
    %92 = vmatpush1.msra.mxu0 %v44
    %93 = vmatprep.subr.mxu0 0.0
    %94 = vmatpush1.msra.mxu0 %v43
    %95 = vmatprep.subr.mxu0 0.0
    %96 = vmatpush1.msra.mxu0 %v42
    %97 = vmatprep.subr.mxu0 0.0
    %98 = vmatpush2.msra.mxu0 0.0
    %99 = vmatprep.subr.mxu0 0.0
    %100 = vmatpush2.msra.mxu0 0.0
    %101 = vmatprep.subr.mxu0 0.0
    %102 = vmatpush2.msra.mxu0 0.0
    %103 = vmatprep.subr.mxu0 0.0
    %104 = vmatpush2.msra.mxu0 0.0
    %105 = vmatprep.subr.mxu0 0.0
    %106 = vmatpush2.msra.mxu0 0.0
    %107 = vmatprep.subr.mxu0 0.0
    %108 = vmatpush2.msra.mxu0 0.0
    %109 = vmatprep.subr.mxu0 0.0
    %110 = vmatpush2.msra.mxu0 0.0
    %111 = vmatprep.subr.mxu0 0.0
    %112 = vmatpush2.msra.mxu0 0.0
    %113 = vmatprep.subr.mxu0 0.0
    %114 = vmatpush2.msra.mxu0 0.0
    %115 = vmatprep.subr.mxu0 0.0
    %116 = vmatpush2.msra.mxu0 0.0
    %117 = vmatprep.subr.mxu0 0.0
    %118 = vmatpush2.msra.mxu0 0.0
    %119 = vmatprep.subr.mxu0 0.0
    %120 = vmatpush2.msra.mxu0 0.0
    %121 = vmatprep.subr.mxu0 0.0
    %122 = vmatpush2.msra.mxu0 0.0
    %123 = vmatprep.subr.mxu0 0.0
    %124 = vmatpush2.msra.mxu0 0.0
    %125 = vmatprep.subr.mxu0 0.0
    %126 = vmatpush2.msra.mxu0 0.0
    %127 = vmatprep.subr.mxu0 0.0
    %128 = vmatpush2.msra.mxu0 0.0
    %129 = vmatprep.mubr.f32.mxu0 0.0
    %130 = vmatmul.mubr.f32.gmra.mxu0 %v41
    %v131 = vpop.f32.mrf.mxu0
    %v132 = vadd.f32 %v63, %v131
    %v133 = vpop.f32.mrf.mxu0
    %134 = vdwg.mxu0
    %v135 = vmax.f32 %v132, 0.0
    %s136 = scalar_lea.vmem [#allocation5], 128
    %v137 = vld [vmem:[%s136] sm:$0xff]
    %v138 = vld [vmem:[%s136 + $0x8] sm:$0xff]
    %v139 = vld [vmem:[%s136 + $0x10] sm:$0xff]
    %v140 = vld [vmem:[%s136 + $0x18] sm:$0xff]
    %v141 = vld [vmem:[%s136 + $0x20] sm:$0xff]
    %v142 = vld [vmem:[%s136 + $0x28] sm:$0xff]
    %v143 = vld [vmem:[%s136 + $0x30] sm:$0xff]
    %v144 = vld [vmem:[%s136 + $0x38] sm:$0xff]
    %v145 = vld [vmem:[%s136 + $0x40] sm:$0xff]
    %v146 = vld [vmem:[%s136 + $0x48] sm:$0xff]
    %v147 = vld [vmem:[%s136 + $0x50] sm:$0xff]
    %v148 = vld [vmem:[%s136 + $0x58] sm:$0xff]
    %v149 = vld [vmem:[%s136 + $0x60] sm:$0xff]
    %v150 = vld [vmem:[%s136 + $0x68] sm:$0xff]
    %v151 = vld [vmem:[%s136 + $0x70] sm:$0xff]
    %v152 = vld [vmem:[%s136 + $0x78] sm:$0xff]
    %s153 = scalar_lea.vmem %s2, 1
    %v154 = vld [vmem:[%s153] sm:$0x1]
    %v156 = vlaneseq
    %v157 = vshrl.u32 %v156, 7
    %v158 = vsub.s32 0, %v157
    %v159 = vrot.slane %v154, %v158
    %161 = vmatprep.subr.mxu0 0.0
    %162 = vmatpush1.msra.mxu0 %v152
    %163 = vmatprep.subr.mxu0 0.0
    %164 = vmatpush1.msra.mxu0 %v151
    %165 = vmatprep.subr.mxu0 0.0
    %166 = vmatpush1.msra.mxu0 %v150
    %167 = vmatprep.subr.mxu0 0.0
    %168 = vmatpush1.msra.mxu0 %v149
    %169 = vmatprep.subr.mxu0 0.0
    %170 = vmatpush1.msra.mxu0 %v148
    %171 = vmatprep.subr.mxu0 0.0
    %172 = vmatpush1.msra.mxu0 %v147
    %173 = vmatprep.subr.mxu0 0.0
    %174 = vmatpush1.msra.mxu0 %v146
    %175 = vmatprep.subr.mxu0 0.0
    %176 = vmatpush1.msra.mxu0 %v145
    %177 = vmatprep.subr.mxu0 0.0
    %178 = vmatpush1.msra.mxu0 %v144
    %179 = vmatprep.subr.mxu0 0.0
    %180 = vmatpush1.msra.mxu0 %v143
    %181 = vmatprep.subr.mxu0 0.0
    %182 = vmatpush1.msra.mxu0 %v142
    %183 = vmatprep.subr.mxu0 0.0
    %184 = vmatpush1.msra.mxu0 %v141
    %185 = vmatprep.subr.mxu0 0.0
    %186 = vmatpush1.msra.mxu0 %v140
    %187 = vmatprep.subr.mxu0 0.0
    %188 = vmatpush1.msra.mxu0 %v139
    %189 = vmatprep.subr.mxu0 0.0
    %190 = vmatpush1.msra.mxu0 %v138
    %191 = vmatprep.subr.mxu0 0.0
    %192 = vmatpush1.msra.mxu0 %v137
    %193 = vmatprep.subr.mxu0 0.0
    %194 = vmatpush2.msra.mxu0 0.0
    %195 = vmatprep.subr.mxu0 0.0
    %196 = vmatpush2.msra.mxu0 0.0
    %197 = vmatprep.subr.mxu0 0.0
    %198 = vmatpush2.msra.mxu0 0.0
    %199 = vmatprep.subr.mxu0 0.0
    %200 = vmatpush2.msra.mxu0 0.0
    %201 = vmatprep.subr.mxu0 0.0
    %202 = vmatpush2.msra.mxu0 0.0
    %203 = vmatprep.subr.mxu0 0.0
    %204 = vmatpush2.msra.mxu0 0.0
    %205 = vmatprep.subr.mxu0 0.0
    %206 = vmatpush2.msra.mxu0 0.0
    %207 = vmatprep.subr.mxu0 0.0
    %208 = vmatpush2.msra.mxu0 0.0
    %209 = vmatprep.subr.mxu0 0.0
    %210 = vmatpush2.msra.mxu0 0.0
    %211 = vmatprep.subr.mxu0 0.0
    %212 = vmatpush2.msra.mxu0 0.0
    %213 = vmatprep.subr.mxu0 0.0
    %214 = vmatpush2.msra.mxu0 0.0
    %215 = vmatprep.subr.mxu0 0.0
    %216 = vmatpush2.msra.mxu0 0.0
    %217 = vmatprep.subr.mxu0 0.0
    %218 = vmatpush2.msra.mxu0 0.0
    %219 = vmatprep.subr.mxu0 0.0
    %220 = vmatpush2.msra.mxu0 0.0
    %221 = vmatprep.subr.mxu0 0.0
    %222 = vmatpush2.msra.mxu0 0.0
    %223 = vmatprep.subr.mxu0 0.0
    %224 = vmatpush2.msra.mxu0 0.0
    %225 = vmatprep.mubr.f32.mxu0 0.0
    %226 = vmatmul.mubr.f32.gmra.mxu0 %v135
    %v227 = vpop.f32.mrf.mxu0
    %v228 = vadd.f32 %v159, %v227
    %v229 = vpop.f32.mrf.mxu0
    %230 = vdwg.mxu0
    %v231 = vmax.f32 %v228, 0.0
    %s232 = scalar_lea.vmem [#allocation5], 256
    %v233 = vld [vmem:[%s232] sm:$0xff]
    %v234 = vld [vmem:[%s232 + $0x8] sm:$0xff]
    %v235 = vld [vmem:[%s232 + $0x10] sm:$0xff]
    %v236 = vld [vmem:[%s232 + $0x18] sm:$0xff]
    %v237 = vld [vmem:[%s232 + $0x20] sm:$0xff]
    %v238 = vld [vmem:[%s232 + $0x28] sm:$0xff]
    %v239 = vld [vmem:[%s232 + $0x30] sm:$0xff]
    %v240 = vld [vmem:[%s232 + $0x38] sm:$0xff]
    %v241 = vld [vmem:[%s232 + $0x40] sm:$0xff]
    %v242 = vld [vmem:[%s232 + $0x48] sm:$0xff]
    %v243 = vld [vmem:[%s232 + $0x50] sm:$0xff]
    %v244 = vld [vmem:[%s232 + $0x58] sm:$0xff]
    %v245 = vld [vmem:[%s232 + $0x60] sm:$0xff]
    %v246 = vld [vmem:[%s232 + $0x68] sm:$0xff]
    %v247 = vld [vmem:[%s232 + $0x70] sm:$0xff]
    %v248 = vld [vmem:[%s232 + $0x78] sm:$0xff]
    %s249 = scalar_lea.vmem %s2, 2
    %v250 = vld [vmem:[%s249] sm:$0x1]
    %v252 = vlaneseq
    %v253 = vshrl.u32 %v252, 7
    %v254 = vsub.s32 0, %v253
    %v255 = vrot.slane %v250, %v254
    %257 = vmatprep.subr.mxu0 0.0
    %258 = vmatpush1.msra.mxu0 %v248
    %259 = vmatprep.subr.mxu0 0.0
    %260 = vmatpush1.msra.mxu0 %v247
    %261 = vmatprep.subr.mxu0 0.0
    %262 = vmatpush1.msra.mxu0 %v246
    %263 = vmatprep.subr.mxu0 0.0
    %264 = vmatpush1.msra.mxu0 %v245
    %265 = vmatprep.subr.mxu0 0.0
    %266 = vmatpush1.msra.mxu0 %v244
    %267 = vmatprep.subr.mxu0 0.0
    %268 = vmatpush1.msra.mxu0 %v243
    %269 = vmatprep.subr.mxu0 0.0
    %270 = vmatpush1.msra.mxu0 %v242
    %271 = vmatprep.subr.mxu0 0.0
    %272 = vmatpush1.msra.mxu0 %v241
    %273 = vmatprep.subr.mxu0 0.0
    %274 = vmatpush1.msra.mxu0 %v240
    %275 = vmatprep.subr.mxu0 0.0
    %276 = vmatpush1.msra.mxu0 %v239
    %277 = vmatprep.subr.mxu0 0.0
    %278 = vmatpush1.msra.mxu0 %v238
    %279 = vmatprep.subr.mxu0 0.0
    %280 = vmatpush1.msra.mxu0 %v237
    %281 = vmatprep.subr.mxu0 0.0
    %282 = vmatpush1.msra.mxu0 %v236
    %283 = vmatprep.subr.mxu0 0.0
    %284 = vmatpush1.msra.mxu0 %v235
    %285 = vmatprep.subr.mxu0 0.0
    %286 = vmatpush1.msra.mxu0 %v234
    %287 = vmatprep.subr.mxu0 0.0
    %288 = vmatpush1.msra.mxu0 %v233
    %289 = vmatprep.subr.mxu0 0.0
    %290 = vmatpush2.msra.mxu0 0.0
    %291 = vmatprep.subr.mxu0 0.0
    %292 = vmatpush2.msra.mxu0 0.0
    %293 = vmatprep.subr.mxu0 0.0
    %294 = vmatpush2.msra.mxu0 0.0
    %295 = vmatprep.subr.mxu0 0.0
    %296 = vmatpush2.msra.mxu0 0.0
    %297 = vmatprep.subr.mxu0 0.0
    %298 = vmatpush2.msra.mxu0 0.0
    %299 = vmatprep.subr.mxu0 0.0
    %300 = vmatpush2.msra.mxu0 0.0
    %301 = vmatprep.subr.mxu0 0.0
    %302 = vmatpush2.msra.mxu0 0.0
    %303 = vmatprep.subr.mxu0 0.0
    %304 = vmatpush2.msra.mxu0 0.0
    %305 = vmatprep.subr.mxu0 0.0
    %306 = vmatpush2.msra.mxu0 0.0
    %307 = vmatprep.subr.mxu0 0.0
    %308 = vmatpush2.msra.mxu0 0.0
    %309 = vmatprep.subr.mxu0 0.0
    %310 = vmatpush2.msra.mxu0 0.0
    %311 = vmatprep.subr.mxu0 0.0
    %312 = vmatpush2.msra.mxu0 0.0
    %313 = vmatprep.subr.mxu0 0.0
    %314 = vmatpush2.msra.mxu0 0.0
    %315 = vmatprep.subr.mxu0 0.0
    %316 = vmatpush2.msra.mxu0 0.0
    %317 = vmatprep.subr.mxu0 0.0
    %318 = vmatpush2.msra.mxu0 0.0
    %319 = vmatprep.subr.mxu0 0.0
    %320 = vmatpush2.msra.mxu0 0.0
    %321 = vmatprep.mubr.f32.mxu0 0.0
    %322 = vmatmul.mubr.f32.gmra.mxu0 %v231
    %v323 = vpop.f32.mrf.mxu0
    %v324 = vadd.f32 %v255, %v323
    %v325 = vpop.f32.mrf.mxu0
    %326 = vdwg.mxu0
    %v327 = vlaneseq
    %v328 = vand.u32 %v327, 127
    %vm329 = vcmp.lt.s32.totalorder %v328, 8
    %v330 = vsel %vm329, %v324, -1e+30
    %331 = vmax.xlane.f32.xlu0 %v330
    %v332 = vpop.xlane.xlu0 %331
    %v333 = vsub.f32 %v330, %v332
    %v334 = vmul.f32 %v333, 1.442695
    %v335 = vpow.pop %v334
    %336 = vadd.xlane.f32.xlu0 %v335
    %v337 = vpop.xlane.xlu0 %336
    %v338 = vrcp.pop %v337
    %v339 = vmul.f32 %v335, %v338
    %vm340 = vcmp.eq.s32.totalorder %v328, 8
    %v341 = vsel %vm340, %v324, 0.0
    %v342 = vadd.f32 %v339, %v341
    %343 = vst [vmem:[#allocation7] sm:$0xff] %v342
    // Predicated region
    $region22: #{tpu_custom_call.1} parent=1 // pred_check
      _
    $region23: #{tpu_custom_call.1} parent=1 // pred_check_branch
      %345 = sbr.rel (0) target = $region25
    $region24: #{tpu_custom_call.1} parent=1 // pred_region
      %s347 = ssub.s32 128, 128
      %348 = vsyncadd [#allocation4], %s347
      %s350 = sshll.u32 [#allocation7], 4
      %s351 = int_to_ptr.vmem [resolvable:$true] %s350
      %353 = dma.vmem_to_hbm [thread:$0]  %s351, 128, %s3, [#allocation4]
    $region25: #{tpu_custom_call.1} parent=1 // pred_fallthru
      _
    // Predicated region
    $region26: #{tpu_custom_call.1} parent=1 // pred_check
      _
    $region27: #{tpu_custom_call.1} parent=1 // pred_check_branch
      %355 = sbr.rel (0) target = $region29
    $region28: #{tpu_custom_call.1} parent=1 // pred_region
      %356 = dma.done [#allocation4], 128
    $region29: #{tpu_custom_call.1} parent=1 // pred_fallthru
      _
    %357 = vsyncpa [#allocation3], 1
    %358 = vsyncpa [#allocation6], 1
    %359 = vsyncpa [#allocation4], 1

</llo_original>
